<compile_context>
chip_gen: v7x
topology: tpu7x:2x2x1
jax: 0.10.0
libtpu: 0.0.40
codegen_flags: <defaults>
</compile_context>

<pallas_src>
import jax
import jax.numpy as jnp
from jax.experimental import pallas as pl
from jax.experimental.pallas import tpu as pltpu


def _sigmoid_kernel(x_ref, o_ref):
    # Upcast so bf16 inputs are computed in f32 (safe on v5e; casts are hidden
    # under the HBM-bound pipeline on v6e/v7x).
    x = x_ref[...].astype(jnp.float32)
    # sigmoid(x) = 0.5*tanh(0.5*x) + 0.5 : a single exact EUP transcendental.
    o_ref[...] = (0.5 * jnp.tanh(0.5 * x) + 0.5).astype(o_ref.dtype)


_LANE = 128
_MAX_COLS = 2048                    # lane-dense width cap (unmasked full vst)
_MIN_KERNEL_ELEMS = 8 * _LANE       # below one (8,128) tile -> pure-JAX fast path


def _choose_cols(total128):
    """Largest multiple-of-128 divisor of total128 (<= _MAX_COLS) that still
    leaves rows >= 8 when possible.  total128 must be a multiple of 128."""
    g = total128 // _LANE
    max_k = min(g, _MAX_COLS // _LANE)
    divisors = [k for k in range(max_k, 0, -1) if g % k == 0]
    for k in divisors:
        if g // k >= 8:
            return k * _LANE
    return divisors[0] * _LANE


def _target_block_bytes():
    """~8 MiB blocks on v7x (64 MiB VMEM, 3.2 TB/s HBM), ~4 MiB elsewhere."""
    try:
        vmem = int(pltpu.get_tpu_info().vmem_capacity_bytes)
    except Exception:
        vmem = 128 * 1024 * 1024
    return 8 * 1024 * 1024 if vmem <= 64 * 1024 * 1024 else 4 * 1024 * 1024


def _choose_row_block(rows, cols, itemsize):
    if rows < 16:
        # Single full-extent block (block dim == array dim satisfies tiling rule).
        return rows
    max_rb = max(8, (_target_block_bytes() // (cols * itemsize)) // 8 * 8)
    half = max(8, (rows // 2) // 8 * 8)   # guarantee >= 2 grid steps (megacore)
    return max(8, min(max_rb, half))


def forward_layers_base(x):
    """ForwardLayersBase.forward: returns (pre_sigmoid, post_sigmoid)."""
    orig_shape = x.shape
    total = int(x.size)

    # Tiny-input fast path: pallas_call launch overhead dwarfs the work.
    if total < _MIN_KERNEL_ELEMS:
        return x, jax.nn.sigmoid(x)

    itemsize = jnp.dtype(x.dtype).itemsize
    x_flat = x.reshape(-1)

    # Ragged totals (not a multiple of 128) are rare for NN activations; pad
    # only the small remainder in that case.  The common case is a free
    # (layout-preserving) reshape with zero extra HBM traffic.
    pad = (-total) % _LANE
    if pad:
        x_flat = jnp.pad(x_flat, (0, pad))
    padded_total = total + pad

    cols = _choose_cols(padded_total)
    rows = padded_total // cols
    row_block = _choose_row_block(rows, cols, itemsize)

    x2d = x_flat.reshape(rows, cols)
    grid = (pl.cdiv(rows, row_block),)      # ragged last block is fine (elementwise)
    spec = pl.BlockSpec((row_block, cols), lambda i: (i, 0))

    n = rows * cols
    cost = pl.CostEstimate(
        flops=3 * n,                 # 2 muls + 1 add per element (tanh counted below)
        transcendentals=n,           # one tanh per element
        bytes_accessed=2 * n * itemsize,
    )

    post2d = pl.pallas_call(
        _sigmoid_kernel,
        out_shape=jax.ShapeDtypeStruct((rows, cols), x.dtype),
        grid_spec=pltpu.PrefetchScalarGridSpec(
            num_scalar_prefetch=0,
            grid=grid,
            in_specs=[spec],
            out_specs=spec,
        ),
        compiler_params=pltpu.CompilerParams(
            dimension_semantics=("parallel",),
            vmem_limit_bytes=48 * 1024 * 1024,
        ),
        cost_estimate=cost,
    )(x2d)

    post = post2d.reshape(-1)
    if pad:
        post = post[:total]
    post = post.reshape(orig_shape)

    # Pre-sigmoid output of the (layer-less) base class is x itself.
    return x, post


if __name__ == "__main__":
    k0, k1, k2 = jax.random.split(jax.random.PRNGKey(0), 3)

    # Main example input (NCHW volume mapped to RGB-ish channels).
    x = jax.random.normal(k0, (2, 4, 16, 16), dtype=jnp.float32)
    pre, post = forward_layers_base(x)
    jax.block_until_ready((pre, post))
    assert pre.shape == x.shape and post.shape == x.shape
    assert bool(jnp.all(pre == x))                               # identity, bit-exact
    assert jnp.allclose(post, jax.nn.sigmoid(x), atol=1e-5, rtol=1e-5)

    # Multi-step grid path (exercises the >=2-block / megacore-sharding path).
    x2 = jax.random.normal(k1, (4, 8, 32, 32), dtype=jnp.float32)
    _, post2 = forward_layers_base(x2)
    jax.block_until_ready(post2)
    assert jnp.allclose(post2, jax.nn.sigmoid(x2), atol=1e-5, rtol=1e-5)

    # Ragged-total path (pad fallback + ragged final grid block).
    x3 = jax.random.normal(k2, (3, 7, 100), dtype=jnp.float32)
    _, post3 = forward_layers_base(x3)
    jax.block_until_ready(post3)
    assert jnp.allclose(post3, jax.nn.sigmoid(x3), atol=1e-5, rtol=1e-5)

    print("KERNEL_OK")
</pallas_src>

<mosaic_0001>
module attributes {stable_mosaic.version = 11 : i64} {
  func.func @_sigmoid_kernel(%arg0: i32, %arg1: memref<8x256xf32, #tpu.memory_space<vmem>>, %arg2: memref<8x256xf32, #tpu.memory_space<vmem>>) attributes {dimension_semantics = [#tpu.dimension_semantics<parallel>], iteration_bounds = array<i64: 1>, scalar_prefetch = 0 : i64, scratch_operands = 0 : i64, tpu.core_type = #tpu.core_type<tc>, window_params = [{transform_indices = @transform_0, window_bounds = array<i64: 8, 256>}, {transform_indices = @transform_1, window_bounds = array<i64: 8, 256>}]} {
    %c0 = arith.constant 0 : index
    %c0_0 = arith.constant 0 : index
    %0 = vector.load %arg1[%c0, %c0_0] : memref<8x256xf32, #tpu.memory_space<vmem>>, vector<8x256xf32>
    %cst = arith.constant 5.000000e-01 : f32
    %1 = vector.broadcast %cst : f32 to vector<8x256xf32>
    %2 = arith.mulf %1, %0 : vector<8x256xf32>
    %3 = math.tanh %2 : vector<8x256xf32>
    %cst_1 = arith.constant 5.000000e-01 : f32
    %4 = vector.broadcast %cst_1 : f32 to vector<8x256xf32>
    %5 = arith.mulf %4, %3 : vector<8x256xf32>
    %cst_2 = arith.constant 5.000000e-01 : f32
    %6 = vector.broadcast %cst_2 : f32 to vector<8x256xf32>
    %7 = arith.addf %5, %6 : vector<8x256xf32>
    %c0_3 = arith.constant 0 : index
    %c0_4 = arith.constant 0 : index
    %8 = vector.load %arg2[%c0_3, %c0_4] : memref<8x256xf32, #tpu.memory_space<vmem>>, vector<8x256xf32>
    tpu.vector_store %arg2[%c0_3, %c0_4], %7 {strides = array<i32>} : memref<8x256xf32, #tpu.memory_space<vmem>>, vector<8x256xf32>,
    return
  }
  func.func @transform_0(%arg0: i32) -> (i32, i32) {
    %c0_i32 = arith.constant 0 : i32
    %c0_i32_0 = arith.constant 0 : i32
    return %arg0, %c0_i32 : i32, i32
  }
  func.func @transform_1(%arg0: i32) -> (i32, i32) {
    %c0_i32 = arith.constant 0 : i32
    %c0_i32_0 = arith.constant 0 : i32
    return %arg0, %c0_i32 : i32, i32
  }
}

</mosaic_0001>

<llo_original>
// kernel: tpu_custom_call.1
$region0: #{tpu_custom_call.1}
  #allocation0 [shape = 'u32[]', space=smem, size = 0x4, offset = 0x4, fixed_abs, tag = 'smem constant byte address 0x4 - core index']
  #allocation1 [shape = 'u32[144,128]{1,0:T(1,128)}', space=vmem, size = 0x12000, scoped, tag = 'internal scratch']
  %s0 = inlined_call_operand.hbm [shape: f32[8,256], index: 0, kind: input, shape index: {}]
  %s1 = inlined_call_operand.hbm [shape: f32[8,256], index: 1, kind: output, shape index: {}]
  %s2 = sld [smem:[#allocation0]]
  $region18: #{tpu_custom_call.1} parent=0
    _
  %s4 = ssub.s32 1, %s2
  %s5 = scalar_select 0, %s4, %s2
  $region1: #{tpu_custom_call.1} parent=0
    #allocation2 [shape = 'u8[8192]{0}', space=vmem, size = 0x2000, scoped, tag = 'input window, operand 0, single buffered']
    #allocation3 [shape = 's32[1]{0}', space=sflag, size = 0x4, scoped, tag = 'scoped memory for tpu_custom_call.1']
    #allocation4 [shape = 's32[1]{0}', space=sflag, size = 0x4, scoped, tag = 'scoped memory for tpu_custom_call.1']
    #allocation5 [shape = 'u8[8192]{0}', space=vmem, size = 0x2000, scoped, tag = 'output window, operand 0, single buffered']
    %6 = vsyncpa [#allocation3], 0
    %7 = vsyncpa [#allocation4], 0
    // Predicated region
    $region2: #{tpu_custom_call.1} parent=1 // pred_check
      _
    $region3: #{tpu_custom_call.1} parent=1 // pred_check_branch
      %9 = sbr.rel (0) target = $region5
    $region4: #{tpu_custom_call.1} parent=1 // pred_region
      %s11 = ssub.s32 256, 256
      %12 = vsyncadd [#allocation3], %s11
      %s14 = sshll.u32 [#allocation2], 4
      %s15 = int_to_ptr.vmem [resolvable:$true] %s14
      %17 = dma.hbm_to_vmem [thread:$0]  %s0, 256, %s15, [#allocation3]
    $region5: #{tpu_custom_call.1} parent=1 // pred_fallthru
      _
    // Predicated region
    $region6: #{tpu_custom_call.1} parent=1 // pred_check
      _
    $region7: #{tpu_custom_call.1} parent=1 // pred_check_branch
      %19 = sbr.rel (0) target = $region9
    $region8: #{tpu_custom_call.1} parent=1 // pred_region
      %20 = dma.done [#allocation3], 256
    $region9: #{tpu_custom_call.1} parent=1 // pred_fallthru
      _
    %v21 = vld [vmem:[#allocation2] sm:$0xff]
    %v22 = vld [vmem:[#allocation2 + $0x8] sm:$0xff]
    %v23 = vmul.f32 %v21, 0.5
    %v24 = vmul.f32 %v22, 0.5
    %v25 = vtanh.pop %v23
    %v26 = vtanh.pop %v24
    %v27 = vmul.f32 %v25, 0.5
    %v28 = vmul.f32 %v26, 0.5
    %v29 = vadd.f32 %v27, 0.5
    %v30 = vadd.f32 %v28, 0.5
    %31 = vst [vmem:[#allocation5] sm:$0xff] %v29
    %32 = vst [vmem:[#allocation5 + $0x8] sm:$0xff] %v30
    // Predicated region
    $region10: #{tpu_custom_call.1} parent=1 // pred_check
      _
    $region11: #{tpu_custom_call.1} parent=1 // pred_check_branch
      %34 = sbr.rel (0) target = $region13
    $region12: #{tpu_custom_call.1} parent=1 // pred_region
      %s36 = ssub.s32 256, 256
      %37 = vsyncadd [#allocation4], %s36
      %s39 = sshll.u32 [#allocation5], 4
      %s40 = int_to_ptr.vmem [resolvable:$true] %s39
      %42 = dma.vmem_to_hbm [thread:$0]  %s40, 256, %s1, [#allocation4]
    $region13: #{tpu_custom_call.1} parent=1 // pred_fallthru
      _
    // Predicated region
    $region14: #{tpu_custom_call.1} parent=1 // pred_check
      _
    $region15: #{tpu_custom_call.1} parent=1 // pred_check_branch
      %44 = sbr.rel (0) target = $region17
    $region16: #{tpu_custom_call.1} parent=1 // pred_region
      %45 = dma.done [#allocation4], 256
    $region17: #{tpu_custom_call.1} parent=1 // pred_fallthru
      _
    %46 = vsyncpa [#allocation3], 1
    %47 = vsyncpa [#allocation4], 1

</llo_original>
